<compile_context>
chip_gen: v6e
topology: v6e:2x2x1
jax: 0.10.0
libtpu: 0.0.40
codegen_flags: <defaults>
</compile_context>

<pallas_src>
import math

import jax
import jax.numpy as jnp
from jax import lax
from jax.experimental import pallas as pl
from jax.experimental.pallas import tpu as pltpu


def _disc_rowwise_kernel(x_ref, s_ref, w_ref, o_ref):
    # h = summary @ W, per-row summary (tile, D) -> MXU
    h = jnp.dot(s_ref[...], w_ref[...], preferred_element_type=jnp.float32)
    prod = x_ref[...].astype(jnp.float32) * h
    # row-wise dot: reduce over the feature (lane) axis -> (tile, 1)
    o_ref[...] = jnp.sum(prod, axis=1, keepdims=True).astype(o_ref.dtype)


def _disc_global_kernel(x_ref, s_ref, w_ref, o_ref):
    # h = summary @ W, single global summary (1, D) -> MXU
    h = jnp.dot(s_ref[...], w_ref[...], preferred_element_type=jnp.float32)
    # out = x . h per row, contracting last dims directly (no transpose).
    out = lax.dot_general(
        x_ref[...].astype(jnp.float32),
        h,
        dimension_numbers=(((1,), (1,)), ((), ())),
        preferred_element_type=jnp.float32,
    )  # (tile, 1)
    o_ref[...] = out.astype(o_ref.dtype)


def discriminator_forward(x, summary, weight, *, row_tile=256):
    """Pallas port of Discriminator.forward.

    x:       (N, D) node features
    summary: (D,) global summary OR (N, D) per-row (already expanded) summary
    weight:  (D, D)
    returns: (N,)
    """
    n, d = x.shape
    tile = n if n <= row_tile else row_tile
    grid = (pl.cdiv(n, tile),)

    x_spec = pl.BlockSpec((tile, d), lambda i: (i, 0))
    w_spec = pl.BlockSpec((d, d), lambda i: (0, 0))
    out_spec = pl.BlockSpec((tile, 1), lambda i: (i, 0))

    if summary.ndim == 1:
        kernel = _disc_global_kernel
        summary = summary.reshape(1, d)
        s_spec = pl.BlockSpec((1, d), lambda i: (0, 0))
    else:
        kernel = _disc_rowwise_kernel
        s_spec = pl.BlockSpec((tile, d), lambda i: (i, 0))

    out = pl.pallas_call(
        kernel,
        out_shape=jax.ShapeDtypeStruct((n, 1), x.dtype),
        grid=grid,
        in_specs=[x_spec, s_spec, w_spec],
        out_specs=out_spec,
        compiler_params=pltpu.CompilerParams(
            dimension_semantics=("parallel",)),
    )(x, summary, weight)
    return out[:, 0]


def _uniform_init(key, size, shape):
    # mirrors torch_geometric's `uniform(size, tensor)`: U(-1/sqrt(size), 1/sqrt(size))
    bound = 1.0 / math.sqrt(size)
    return jax.random.uniform(key, shape, dtype=jnp.float32,
                              minval=-bound, maxval=bound)


if __name__ == "__main__":
    D = 32  # hidden_dim
    key = jax.random.PRNGKey(0)
    kw, kx1, ks1, kx2, ks2 = jax.random.split(key, 5)

    weight = _uniform_init(kw, D, (D, D))

    # Case 1: small graph, per-node (expanded) summary -- typical DGI usage.
    N1 = 8
    x1 = jax.random.normal(kx1, (N1, D), dtype=jnp.float32)
    s1 = jax.random.normal(ks1, (N1, D), dtype=jnp.float32)
    out1 = discriminator_forward(x1, s1, weight)
    jax.block_until_ready(out1)
    ref1 = jnp.sum(x1 * (s1 @ weight), axis=1)
    assert out1.shape == (N1,), out1.shape
    assert jnp.allclose(out1, ref1, atol=1e-4, rtol=1e-4), "rowwise mismatch"

    # Case 2: global (D,) summary + enough rows to exercise the parallel grid.
    N2 = 512
    x2 = jax.random.normal(kx2, (N2, D), dtype=jnp.float32)
    s2 = jax.random.normal(ks2, (D,), dtype=jnp.float32)
    out2 = discriminator_forward(x2, s2, weight)
    jax.block_until_ready(out2)
    ref2 = jnp.sum(x2 * (s2 @ weight)[None, :], axis=1)
    assert out2.shape == (N2,), out2.shape
    assert jnp.allclose(out2, ref2, atol=1e-4, rtol=1e-4), "global mismatch"

    print("KERNEL_OK")
</pallas_src>

<mosaic_0001>
module attributes {stable_mosaic.version = 11 : i64} {
  func.func @_disc_rowwise_kernel(%arg0: i32, %arg1: memref<8x32xf32, #tpu.memory_space<vmem>>, %arg2: memref<8x32xf32, #tpu.memory_space<vmem>>, %arg3: memref<32x32xf32, #tpu.memory_space<vmem>>, %arg4: memref<8x1xf32, #tpu.memory_space<vmem>>) attributes {dimension_semantics = [#tpu.dimension_semantics<parallel>], iteration_bounds = array<i64: 1>, scalar_prefetch = 0 : i64, scratch_operands = 0 : i64, tpu.core_type = #tpu.core_type<tc>, window_params = [{transform_indices = @transform_0, window_bounds = array<i64: 8, 32>}, {transform_indices = @transform_1, window_bounds = array<i64: 8, 32>}, {pipeline_mode = #tpu.pipeline_mode<synchronous>, transform_indices = @transform_2, window_bounds = array<i64: 32, 32>}, {transform_indices = @transform_3, window_bounds = array<i64: 8, 1>}]} {
    %c0 = arith.constant 0 : index
    %c0_0 = arith.constant 0 : index
    %0 = vector.load %arg2[%c0, %c0_0] : memref<8x32xf32, #tpu.memory_space<vmem>>, vector<8x32xf32>
    %c0_1 = arith.constant 0 : index
    %c0_2 = arith.constant 0 : index
    %1 = vector.load %arg3[%c0_1, %c0_2] : memref<32x32xf32, #tpu.memory_space<vmem>>, vector<32x32xf32>
    %cst = arith.constant dense<0.000000e+00> : vector<8x32xf32>
    %2 = tpu.matmul %0, %1, %cst {dimension_numbers = #tpu.dot_dimension_numbers<[1], [0], [0], [1], [0, 0, 1, 1], [], []>} : vector<8x32xf32>, vector<32x32xf32>, vector<8x32xf32> -> vector<8x32xf32>
    %c0_3 = arith.constant 0 : index
    %c0_4 = arith.constant 0 : index
    %3 = vector.load %arg1[%c0_3, %c0_4] : memref<8x32xf32, #tpu.memory_space<vmem>>, vector<8x32xf32>
    %4 = arith.mulf %3, %2 : vector<8x32xf32>
    %cst_5 = arith.constant dense<0.000000e+00> : vector<8xf32>
    %5 = vector.multi_reduction <add>, %4, %cst_5 [1] : vector<8x32xf32> to vector<8xf32>
    %6 = vector.shape_cast %5 : vector<8xf32> to vector<8x1xf32>
    %c0_6 = arith.constant 0 : index
    %c0_7 = arith.constant 0 : index
    %7 = vector.load %arg4[%c0_6, %c0_7] : memref<8x1xf32, #tpu.memory_space<vmem>>, vector<8x1xf32>
    tpu.vector_store %arg4[%c0_6, %c0_7], %6 {strides = array<i32>} : memref<8x1xf32, #tpu.memory_space<vmem>>, vector<8x1xf32>,
    return
  }
  func.func @transform_0(%arg0: i32) -> (i32, i32) {
    %c0_i32 = arith.constant 0 : i32
    %c0_i32_0 = arith.constant 0 : i32
    return %arg0, %c0_i32 : i32, i32
  }
  func.func @transform_1(%arg0: i32) -> (i32, i32) {
    %c0_i32 = arith.constant 0 : i32
    %c0_i32_0 = arith.constant 0 : i32
    return %arg0, %c0_i32 : i32, i32
  }
  func.func @transform_2(%arg0: i32) -> (i32, i32) {
    %c0_i32 = arith.constant 0 : i32
    %c0_i32_0 = arith.constant 0 : i32
    %c0_i32_1 = arith.constant 0 : i32
    return %c0_i32, %c0_i32_0 : i32, i32
  }
  func.func @transform_3(%arg0: i32) -> (i32, i32) {
    %c0_i32 = arith.constant 0 : i32
    %c0_i32_0 = arith.constant 0 : i32
    return %arg0, %c0_i32 : i32, i32
  }
}

</mosaic_0001>

<llo_original>
// kernel: tpu_custom_call.1
$region0: #{tpu_custom_call.1}
  #allocation0 [shape = 'u32[]', space=smem, size = 0x4, offset = 0x4, fixed_abs, tag = 'smem constant byte address 0x4 - core index']
  #allocation1 [shape = 'u32[144,128]{1,0:T(1,128)}', space=vmem, size = 0x12000, scoped, tag = 'internal scratch']
  %s0 = inlined_call_operand.hbm [shape: f32[8,32], index: 0, kind: input, shape index: {}]
  %s1 = inlined_call_operand.hbm [shape: f32[8,32], index: 1, kind: input, shape index: {}]
  %s2 = inlined_call_operand.hbm [shape: f32[32,32], index: 2, kind: input, shape index: {}]
  %s3 = inlined_call_operand.vmem [shape: f32[8,1], index: 3, kind: output, shape index: {}]
  %s4 = sld [smem:[#allocation0]]
  $region34: #{tpu_custom_call.1} parent=0
    _
  %s6 = ssub.s32 1, %s4
  %s7 = scalar_select 0, %s6, %s4
  $region1: #{tpu_custom_call.1} parent=0
    #allocation2 [shape = 'u8[4096]{0}', space=vmem, size = 0x1000, scoped, tag = 'input window, operand 0, single buffered']
    #allocation3 [shape = 's32[1]{0}', space=sflag, size = 0x4, scoped, tag = 'scoped memory for tpu_custom_call.1']
    #allocation4 [shape = 'u8[4096]{0}', space=vmem, size = 0x1000, scoped, tag = 'input window, operand 1, single buffered']
    #allocation5 [shape = 's32[1]{0}', space=sflag, size = 0x4, scoped, tag = 'scoped memory for tpu_custom_call.1']
    #allocation6 [shape = 'u8[16384]{0}', space=vmem, size = 0x4000, scoped, tag = 'input window, operand 2, single buffered']
    %8 = vsyncpa [#allocation3], 0
    %9 = vsyncpa [#allocation5], 0
    // Predicated region
    $region2: #{tpu_custom_call.1} parent=1 // pred_check
      _
    $region3: #{tpu_custom_call.1} parent=1 // pred_check_branch
      %11 = sbr.rel (0) target = $region5
    $region4: #{tpu_custom_call.1} parent=1 // pred_region
      %s13 = ssub.s32 128, 128
      %14 = vsyncadd [#allocation3], %s13
      %s16 = sshll.u32 [#allocation2], 4
      %s17 = int_to_ptr.vmem [resolvable:$true] %s16
      %19 = dma.hbm_to_vmem [thread:$0]  %s0, 128, %s17, [#allocation3]
    $region5: #{tpu_custom_call.1} parent=1 // pred_fallthru
      _
    // Predicated region
    $region6: #{tpu_custom_call.1} parent=1 // pred_check
      _
    $region7: #{tpu_custom_call.1} parent=1 // pred_check_branch
      %21 = sbr.rel (0) target = $region9
    $region8: #{tpu_custom_call.1} parent=1 // pred_region
      %s23 = ssub.s32 128, 128
      %24 = vsyncadd [#allocation5], %s23
      %s26 = sshll.u32 [#allocation4], 4
      %s27 = int_to_ptr.vmem [resolvable:$true] %s26
      %29 = dma.hbm_to_vmem [thread:$0]  %s1, 128, %s27, [#allocation5]
    $region9: #{tpu_custom_call.1} parent=1 // pred_fallthru
      _
    // Predicated region
    $region10: #{tpu_custom_call.1} parent=1 // pred_check
      _
    $region11: #{tpu_custom_call.1} parent=1 // pred_check_branch
      %31 = sbr.rel (0) target = $region13
    $region12: #{tpu_custom_call.1} parent=1 // pred_region
      %s33 = ssub.s32 512, 512
      %34 = vsyncadd [#allocation5], %s33
      %s35 = sshll.u32 [#allocation6], 4
      %s36 = int_to_ptr.vmem [resolvable:$true] %s35
      %41 = dma.hbm_to_vmem [thread:$0]  %s2, 512, %s36, [#allocation5], 128, 128, 8
    $region13: #{tpu_custom_call.1} parent=1 // pred_fallthru
      _
    // Predicated region
    $region14: #{tpu_custom_call.1} parent=1 // pred_check
      _
    $region15: #{tpu_custom_call.1} parent=1 // pred_check_branch
      %43 = sbr.rel (0) target = $region17
    $region16: #{tpu_custom_call.1} parent=1 // pred_region
      %44 = dma.done [#allocation3], 128
    $region17: #{tpu_custom_call.1} parent=1 // pred_fallthru
      _
    // Predicated region
    $region18: #{tpu_custom_call.1} parent=1 // pred_check
      _
    $region19: #{tpu_custom_call.1} parent=1 // pred_check_branch
      %46 = sbr.rel (0) target = $region21
    $region20: #{tpu_custom_call.1} parent=1 // pred_region
      %47 = dma.done [#allocation5], 128
    $region21: #{tpu_custom_call.1} parent=1 // pred_fallthru
      _
    // Predicated region
    $region22: #{tpu_custom_call.1} parent=1 // pred_check
      _
    $region23: #{tpu_custom_call.1} parent=1 // pred_check_branch
      %49 = sbr.rel (0) target = $region25
    $region24: #{tpu_custom_call.1} parent=1 // pred_region
      %50 = dma.done [#allocation5], 512
    $region25: #{tpu_custom_call.1} parent=1 // pred_fallthru
      _
    %v51 = vld [vmem:[#allocation4] sm:$0xff]
    %v52 = vld [vmem:[#allocation6] sm:$0xff]
    %v53 = vld [vmem:[#allocation6 + $0x8] sm:$0xff]
    %v54 = vld [vmem:[#allocation6 + $0x10] sm:$0xff]
    %v55 = vld [vmem:[#allocation6 + $0x18] sm:$0xff]
    %vm56 = vcmask 261120
    %v58 = vsel %vm56, %v51, 0
    %60 = vmatprep.subr.mxu0 0.0
    %61 = vmatpush1.msra.mxu0 0.0
    %62 = vmatprep.subr.mxu0 0.0
    %63 = vmatpush1.msra.mxu0 0.0
    %64 = vmatprep.subr.mxu0 0.0
    %65 = vmatpush1.msra.mxu0 0.0
    %66 = vmatprep.subr.mxu0 0.0
    %67 = vmatpush1.msra.mxu0 0.0
    %68 = vmatprep.subr.mxu0 0.0
    %69 = vmatpush1.msra.mxu0 0.0
    %70 = vmatprep.subr.mxu0 0.0
    %71 = vmatpush1.msra.mxu0 0.0
    %72 = vmatprep.subr.mxu0 0.0
    %73 = vmatpush1.msra.mxu0 0.0
    %74 = vmatprep.subr.mxu0 0.0
    %75 = vmatpush1.msra.mxu0 0.0
    %76 = vmatprep.subr.mxu0 0.0
    %77 = vmatpush1.msra.mxu0 0.0
    %78 = vmatprep.subr.mxu0 0.0
    %79 = vmatpush1.msra.mxu0 0.0
    %80 = vmatprep.subr.mxu0 0.0
    %81 = vmatpush1.msra.mxu0 0.0
    %82 = vmatprep.subr.mxu0 0.0
    %83 = vmatpush1.msra.mxu0 0.0
    %84 = vmatprep.subr.mxu0 0.0
    %85 = vmatpush1.msra.mxu0 %v55
    %86 = vmatprep.subr.mxu0 0.0
    %87 = vmatpush1.msra.mxu0 %v54
    %88 = vmatprep.subr.mxu0 0.0
    %89 = vmatpush1.msra.mxu0 %v53
    %90 = vmatprep.subr.mxu0 0.0
    %91 = vmatpush1.msra.mxu0 %v52
    %92 = vmatprep.subr.mxu0 0.0
    %93 = vmatpush2.msra.mxu0 0.0
    %94 = vmatprep.subr.mxu0 0.0
    %95 = vmatpush2.msra.mxu0 0.0
    %96 = vmatprep.subr.mxu0 0.0
    %97 = vmatpush2.msra.mxu0 0.0
    %98 = vmatprep.subr.mxu0 0.0
    %99 = vmatpush2.msra.mxu0 0.0
    %100 = vmatprep.subr.mxu0 0.0
    %101 = vmatpush2.msra.mxu0 0.0
    %102 = vmatprep.subr.mxu0 0.0
    %103 = vmatpush2.msra.mxu0 0.0
    %104 = vmatprep.subr.mxu0 0.0
    %105 = vmatpush2.msra.mxu0 0.0
    %106 = vmatprep.subr.mxu0 0.0
    %107 = vmatpush2.msra.mxu0 0.0
    %108 = vmatprep.subr.mxu0 0.0
    %109 = vmatpush2.msra.mxu0 0.0
    %110 = vmatprep.subr.mxu0 0.0
    %111 = vmatpush2.msra.mxu0 0.0
    %112 = vmatprep.subr.mxu0 0.0
    %113 = vmatpush2.msra.mxu0 0.0
    %114 = vmatprep.subr.mxu0 0.0
    %115 = vmatpush2.msra.mxu0 0.0
    %116 = vmatprep.subr.mxu0 0.0
    %117 = vmatpush2.msra.mxu0 0.0
    %118 = vmatprep.subr.mxu0 0.0
    %119 = vmatpush2.msra.mxu0 0.0
    %120 = vmatprep.subr.mxu0 0.0
    %121 = vmatpush2.msra.mxu0 0.0
    %122 = vmatprep.subr.mxu0 0.0
    %123 = vmatpush2.msra.mxu0 0.0
    %124 = vmatprep.mubr.f32.mxu0 0.0
    %125 = vmatmul.mubr.f32.gmra.mxu0 %v58
    %v126 = vpop.f32.mrf.mxu0
    %v127 = vadd.f32 0.0, %v126
    %v128 = vpop.f32.mrf.mxu0
    %129 = vdwg.mxu0
    %v130 = vld [vmem:[#allocation2] sm:$0xff]
    %v131 = vmul.f32 %v130, %v127
    %v132 = vsel %vm56, %v131, 0.0
    %133 = vadd.xlane.f32.xlu0 %v132
    %v134 = vpop.xlane.xlu0 %133
    %vm135 = vcmask 7168
    %136 = vst.msk [vmem:[%s3] sm:$0xff] %vm135, %v134
    // Predicated region
    $region26: #{tpu_custom_call.1} parent=1 // pred_check
      _
    $region27: #{tpu_custom_call.1} parent=1 // pred_check_branch
      %138 = sbr.rel (0) target = $region29
    $region28: #{tpu_custom_call.1} parent=1 // pred_region
      _
    $region29: #{tpu_custom_call.1} parent=1 // pred_fallthru
      _
    // Predicated region
    $region30: #{tpu_custom_call.1} parent=1 // pred_check
      _
    $region31: #{tpu_custom_call.1} parent=1 // pred_check_branch
      %140 = sbr.rel (0) target = $region33
    $region32: #{tpu_custom_call.1} parent=1 // pred_region
      _
    $region33: #{tpu_custom_call.1} parent=1 // pred_fallthru
      _
    %141 = vsyncpa [#allocation3], 1
    %142 = vsyncpa [#allocation5], 1

</llo_original>
